<compile_context>
chip_gen: v7x
topology: tpu7x:2x2x1
jax: 0.10.0
libtpu: 0.0.40
codegen_flags: <defaults>
</compile_context>

<pallas_src>
import functools

import jax
import jax.numpy as jnp
from jax.experimental import pallas as pl
from jax.experimental.pallas import tpu as pltpu


def _vmem_capacity_bytes():
    """Physical VMEM of the current TPU generation (fallback: v7x's 64 MiB)."""
    try:
        return int(pltpu.get_tpu_info().vmem_capacity_bytes)
    except Exception:
        return 64 * 1024 * 1024


def _channel_attention_kernel(x_ref, w_ref, o_ref, acc_ref, *,
                              inv_hw, hw, hw_tile):
    # x_ref: (n_blk, C, hw_tile)   w_ref: (C_out, C_in)
    # o_ref: (n_blk, C)            acc_ref: (n_blk, C) f32 scratch
    k = pl.program_id(1)

    @pl.when(k == 0)
    def _():
        acc_ref[...] = jnp.zeros_like(acc_ref)

    # Partial spatial sum for this HW tile, accumulated in f32.
    x = x_ref[...].astype(jnp.float32)

    rem = hw % hw_tile            # static Python int
    if rem:
        # Unpadded input: the last HW block overruns the array and its tail is
        # undefined -- zero it so it does not pollute the pooled sum.
        valid = hw - k * hw_tile  # == hw_tile for all but the last step
        lane = jax.lax.broadcasted_iota(jnp.int32, x.shape, dimension=2)
        x = jnp.where(lane < valid, x, 0.0)

    acc_ref[...] += jnp.sum(x, axis=-1)

    @pl.when(k == pl.num_programs(1) - 1)
    def _():
        pooled = acc_ref[...] * inv_hw                       # (n_blk, C) f32
        w = w_ref[...].astype(jnp.float32)
        # 1x1 conv (no bias): contract pooled's C_in with weight's C_in axis
        # directly -- no materialized transpose.
        y = jax.lax.dot_general(
            pooled, w,
            dimension_numbers=(((1,), (1,)), ((), ())),
            preferred_element_type=jnp.float32,
        )                                                    # (n_blk, C_out)
        y = jax.nn.sigmoid(jnp.maximum(y, 0.0))
        o_ref[...] = y.astype(o_ref.dtype)


def channel_attention(x, weight, *, hw_tile=None):
    """x: (N, C, H, W); weight: Conv2d(C, C, 1, bias=False) weight, (C, C) or
    (C, C, 1, 1). Returns sigmoid(relu(conv1x1(avg_pool(x)))) of shape
    (N, C, 1, 1)."""
    N, C, H, W = x.shape
    if weight.ndim == 4:
        weight = weight.reshape(weight.shape[0], weight.shape[1])
    HW = H * W
    dt_bytes = jnp.dtype(x.dtype).itemsize

    # ---- per-generation block budget (x blocks are double-buffered) --------
    vmem_cap = _vmem_capacity_bytes()
    block_budget = int(min(8 * 1024 * 1024, max(vmem_cap // 8, 2 * 1024 * 1024)))
    vmem_limit = int(min(vmem_cap * 3 // 4, 96 * 1024 * 1024))

    # ---- row (batch) block: multiple of 8 or the full extent N -------------
    n_blk = 8 if (N % 8 == 0) else N
    row_bytes = max(1, n_blk * C * dt_bytes)

    # ---- spatial (lane) tile ------------------------------------------------
    if hw_tile is None:
        max_lanes = block_budget // row_bytes
        if max_lanes >= HW:
            hw_tile = HW                          # single step, no pad, no mask
        else:
            hw_tile = max(128, (max_lanes // 128) * 128)
            if hw_tile >= HW:
                hw_tile = HW
    assert hw_tile <= HW, "hw_tile must not exceed H*W"
    assert hw_tile == HW or hw_tile % 128 == 0, \
        "hw_tile must equal H*W or be a multiple of 128"

    # Single-step reduction: spend leftover budget on more rows per block, but
    # keep >= 2 row blocks so both v7x TensorCores get work on the parallel
    # axis (neutral on single-core v5e/v6e).
    if hw_tile == HW and N % 8 == 0:
        grown = n_blk
        while (N % (grown * 2) == 0 and N // (grown * 2) >= 2
               and (grown * 2) * C * HW * dt_bytes <= block_budget):
            grown *= 2
        n_blk = grown

    grid = (N // n_blk, pl.cdiv(HW, hw_tile))

    x3 = x.reshape(N, C, HW)      # pure view change, no extra HBM traffic

    kernel = functools.partial(_channel_attention_kernel,
                               inv_hw=1.0 / float(HW), hw=HW, hw_tile=hw_tile)

    cost = pl.CostEstimate(
        flops=N * C * HW + 2 * N * C * C,
        transcendentals=N * C,
        bytes_accessed=(x3.size * dt_bytes
                        + weight.size * jnp.dtype(weight.dtype).itemsize
                        + N * C * dt_bytes),
    )

    out = pl.pallas_call(
        kernel,
        out_shape=jax.ShapeDtypeStruct((N, C), x.dtype),
        grid_spec=pltpu.PrefetchScalarGridSpec(
            num_scalar_prefetch=0,
            grid=grid,
            in_specs=[
                # x tile: (batch block, full channels) x HW tile.
                pl.BlockSpec((n_blk, C, hw_tile), lambda i, k: (i, 0, k)),
                # weight: constant block index -> DMA'd once, stays resident.
                pl.BlockSpec((C, C), lambda i, k: (0, 0)),
            ],
            out_specs=pl.BlockSpec((n_blk, C), lambda i, k: (i, 0)),
            scratch_shapes=[pltpu.VMEM((n_blk, C), jnp.float32)],
        ),
        compiler_params=pltpu.CompilerParams(
            dimension_semantics=("parallel", "arbitrary"),
            vmem_limit_bytes=vmem_limit,
        ),
        cost_estimate=cost,
    )(x3, weight)

    return out.reshape(N, C, 1, 1)


def _reference(x, weight):
    if weight.ndim == 4:
        weight = weight.reshape(weight.shape[0], weight.shape[1])
    pooled = jnp.mean(x.astype(jnp.float32), axis=(2, 3))   # (N, C)
    y = pooled @ weight.astype(jnp.float32).T               # (N, C)
    y = jax.nn.sigmoid(jnp.maximum(y, 0.0))
    return y.reshape(x.shape[0], x.shape[1], 1, 1).astype(x.dtype)


if __name__ == "__main__":
    key = jax.random.PRNGKey(0)
    kx, kw, kx2 = jax.random.split(key, 3)

    # Primary shapes from the module spec.
    N, C, H, W = 2, 4, 16, 16
    x = jax.random.normal(kx, (N, C, H, W), dtype=jnp.float32)
    # Conv2d(C, C, 1, bias=False) weight (C_out, C_in, 1, 1) kept as (C_out, C_in).
    weight = jax.random.normal(kw, (C, C), dtype=jnp.float32) * 0.1

    ref = _reference(x, weight)

    # Auto-tiled path: H*W=256 fits one block -> single reduction step.
    out = channel_attention(x, weight)
    out = jax.block_until_ready(out)
    assert out.shape == (N, C, 1, 1)
    assert jnp.allclose(out, ref, atol=1e-5, rtol=1e-5)

    # Force a multi-step HW reduction (256 -> 2 tiles of 128) to exercise the
    # accumulator init / accumulate / epilogue path.
    out2 = channel_attention(x, weight, hw_tile=128)
    out2 = jax.block_until_ready(out2)
    assert jnp.allclose(out2, ref, atol=1e-5, rtol=1e-5)

    # Ragged spatial extent (H*W=144, hw_tile=128) exercises the in-kernel
    # mask on the unpadded last tile (no host-side jnp.pad anymore).
    x2 = jax.random.normal(kx2, (2, 8, 12, 12), dtype=jnp.float32)
    w2 = jax.random.normal(kw, (8, 8), dtype=jnp.float32) * 0.1
    out3 = channel_attention(x2, w2, hw_tile=128)
    out3 = jax.block_until_ready(out3)
    assert jnp.allclose(out3, _reference(x2, w2), atol=1e-5, rtol=1e-5)

    print("KERNEL_OK")
</pallas_src>

<mosaic_0001>
module attributes {stable_mosaic.version = 11 : i64} {
  func.func @_channel_attention_kernel(%arg0: i32, %arg1: i32, %arg2: memref<2x4x256xf32, #tpu.memory_space<vmem>>, %arg3: memref<4x4xf32, #tpu.memory_space<vmem>>, %arg4: memref<2x4xf32, #tpu.memory_space<vmem>>, %arg5: memref<2x4xf32, #tpu.memory_space<vmem>>) attributes {dimension_semantics = [#tpu.dimension_semantics<parallel>, #tpu.dimension_semantics<arbitrary>], iteration_bounds = array<i64: 1, 1>, scalar_prefetch = 0 : i64, scratch_operands = 1 : i64, tpu.core_type = #tpu.core_type<tc>, window_params = [{transform_indices = @transform_0, window_bounds = array<i64: 2, 4, 256>}, {pipeline_mode = #tpu.pipeline_mode<synchronous>, transform_indices = @transform_1, window_bounds = array<i64: 4, 4>}, {transform_indices = @transform_2, window_bounds = array<i64: 2, 4>}]} {
    %c0_i32 = arith.constant 0 : i32
    %0 = arith.cmpi eq, %arg1, %c0_i32 : i32
    %1 = arith.extui %0 : i1 to i32
    %c0_i32_0 = arith.constant 0 : i32
    %2 = arith.cmpi ne, %1, %c0_i32_0 : i32
    scf.if %2 {
      %cst_9 = arith.constant 0.000000e+00 : f32
      %11 = vector.broadcast %cst_9 : f32 to vector<2x4xf32>
      %c0_10 = arith.constant 0 : index
      %c0_11 = arith.constant 0 : index
      %12 = vector.load %arg5[%c0_10, %c0_11] : memref<2x4xf32, #tpu.memory_space<vmem>>, vector<2x4xf32>
      tpu.vector_store %arg5[%c0_10, %c0_11], %11 {strides = array<i32>} : memref<2x4xf32, #tpu.memory_space<vmem>>, vector<2x4xf32>,
    } else {
    }
    %c0 = arith.constant 0 : index
    %c0_1 = arith.constant 0 : index
    %c0_2 = arith.constant 0 : index
    %3 = vector.load %arg2[%c0, %c0_1, %c0_2] : memref<2x4x256xf32, #tpu.memory_space<vmem>>, vector<2x4x256xf32>
    %c0_3 = arith.constant 0 : index
    %c0_4 = arith.constant 0 : index
    %4 = vector.load %arg5[%c0_3, %c0_4] : memref<2x4xf32, #tpu.memory_space<vmem>>, vector<2x4xf32>
    %cst = arith.constant dense<0.000000e+00> : vector<2x4xf32>
    %5 = vector.multi_reduction <add>, %3, %cst [2] : vector<2x4x256xf32> to vector<2x4xf32>
    %6 = arith.addf %4, %5 : vector<2x4xf32>
    %c0_5 = arith.constant 0 : index
    %c0_6 = arith.constant 0 : index
    %7 = vector.load %arg5[%c0_5, %c0_6] : memref<2x4xf32, #tpu.memory_space<vmem>>, vector<2x4xf32>
    tpu.vector_store %arg5[%c0_5, %c0_6], %6 {strides = array<i32>} : memref<2x4xf32, #tpu.memory_space<vmem>>, vector<2x4xf32>,
    %c0_i32_7 = arith.constant 0 : i32
    %8 = arith.cmpi eq, %arg1, %c0_i32_7 : i32
    %9 = arith.extui %8 : i1 to i32
    %c0_i32_8 = arith.constant 0 : i32
    %10 = arith.cmpi ne, %9, %c0_i32_8 : i32
    scf.if %10 {
      %c0_9 = arith.constant 0 : index
      %c0_10 = arith.constant 0 : index
      %11 = vector.load %arg5[%c0_9, %c0_10] : memref<2x4xf32, #tpu.memory_space<vmem>>, vector<2x4xf32>
      %cst_11 = arith.constant 3.906250e-03 : f32
      %12 = vector.broadcast %cst_11 : f32 to vector<2x4xf32>
      %13 = arith.mulf %11, %12 : vector<2x4xf32>
      %c0_12 = arith.constant 0 : index
      %c0_13 = arith.constant 0 : index
      %14 = vector.load %arg3[%c0_12, %c0_13] : memref<4x4xf32, #tpu.memory_space<vmem>>, vector<4x4xf32>
      %cst_14 = arith.constant dense<0.000000e+00> : vector<2x4xf32>
      %15 = tpu.matmul %13, %14, %cst_14 {dimension_numbers = #tpu.dot_dimension_numbers<[1], [1], [0], [0], [0, 0, 1, 0], [], []>} : vector<2x4xf32>, vector<4x4xf32>, vector<2x4xf32> -> vector<2x4xf32>
      %cst_15 = arith.constant 0.000000e+00 : f32
      %16 = vector.broadcast %cst_15 : f32 to vector<2x4xf32>
      %17 = arith.maximumf %15, %16 : vector<2x4xf32>
      %18 = arith.negf %17 : vector<2x4xf32>
      %19 = math.exp %18 : vector<2x4xf32>
      %cst_16 = arith.constant 1.000000e+00 : f32
      %20 = vector.broadcast %cst_16 : f32 to vector<2x4xf32>
      %21 = arith.addf %20, %19 : vector<2x4xf32>
      %22 = arith.divf %20, %21 : vector<2x4xf32>
      %c0_17 = arith.constant 0 : index
      %c0_18 = arith.constant 0 : index
      %23 = vector.load %arg4[%c0_17, %c0_18] : memref<2x4xf32, #tpu.memory_space<vmem>>, vector<2x4xf32>
      tpu.vector_store %arg4[%c0_17, %c0_18], %22 {strides = array<i32>} : memref<2x4xf32, #tpu.memory_space<vmem>>, vector<2x4xf32>,
    } else {
    }
    return
  }
  func.func @transform_0(%arg0: i32, %arg1: i32) -> (i32, i32, i32) {
    %c0_i32 = arith.constant 0 : i32
    %c0_i32_0 = arith.constant 0 : i32
    return %arg0, %c0_i32, %arg1 : i32, i32, i32
  }
  func.func @transform_1(%arg0: i32, %arg1: i32) -> (i32, i32) {
    %c0_i32 = arith.constant 0 : i32
    %c0_i32_0 = arith.constant 0 : i32
    %c0_i32_1 = arith.constant 0 : i32
    return %c0_i32, %c0_i32_0 : i32, i32
  }
  func.func @transform_2(%arg0: i32, %arg1: i32) -> (i32, i32) {
    %c0_i32 = arith.constant 0 : i32
    %c0_i32_0 = arith.constant 0 : i32
    return %arg0, %c0_i32 : i32, i32
  }
}

</mosaic_0001>

<llo_original>
// kernel: tpu_custom_call.1
$region0: #{tpu_custom_call.1}
  #allocation0 [shape = 'u32[]', space=smem, size = 0x4, offset = 0x4, fixed_abs, tag = 'smem constant byte address 0x4 - core index']
  #allocation1 [shape = 'u32[144,128]{1,0:T(1,128)}', space=vmem, size = 0x12000, scoped, tag = 'internal scratch']
  #allocation2 [shape = 'f32[2,4]{1,0:T(2,128)}', space=vmem, size = 0x400, scoped, tag = 'scratch operand']
  %s0 = inlined_call_operand.hbm [shape: f32[2,4,256], index: 0, kind: input, shape index: {}]
  %s1 = inlined_call_operand.hbm [shape: f32[4,4], index: 1, kind: input, shape index: {}]
  %s2 = inlined_call_operand.hbm [shape: f32[2,4], index: 2, kind: output, shape index: {}]
  %s3 = sld [smem:[#allocation0]]
  $region34: #{tpu_custom_call.1} parent=0
    _
  %s5 = ssub.s32 1, %s3
  %s6 = scalar_select 0, %s5, %s3
  $region1: #{tpu_custom_call.1} parent=0
    #allocation3 [shape = 'u8[8192]{0}', space=vmem, size = 0x2000, scoped, tag = 'input window, operand 0, single buffered']
    #allocation4 [shape = 's32[1]{0}', space=sflag, size = 0x4, scoped, tag = 'scoped memory for tpu_custom_call.1']
    #allocation5 [shape = 's32[1]{0}', space=sflag, size = 0x4, scoped, tag = 'scoped memory for tpu_custom_call.1']
    #allocation6 [shape = 'u8[2048]{0}', space=vmem, size = 0x800, scoped, tag = 'input window, operand 1, single buffered']
    #allocation7 [shape = 's32[1]{0}', space=sflag, size = 0x4, scoped, tag = 'scoped memory for tpu_custom_call.1']
    #allocation8 [shape = 'u8[1024]{0}', space=vmem, size = 0x400, scoped, tag = 'output window, operand 0, single buffered']
    %7 = vsyncpa [#allocation4], 0
    %8 = vsyncpa [#allocation7], 0
    %9 = vsyncpa [#allocation5], 0
    // Predicated region
    $region2: #{tpu_custom_call.1} parent=1 // pred_check
      _
    $region3: #{tpu_custom_call.1} parent=1 // pred_check_branch
      %11 = sbr.rel (0) target = $region5
    $region4: #{tpu_custom_call.1} parent=1 // pred_region
      %s13 = ssub.s32 256, 256
      %14 = vsyncadd [#allocation4], %s13
      %s15 = sshll.u32 [#allocation3], 4
      %s16 = int_to_ptr.vmem [resolvable:$true] %s15
      %21 = dma.hbm_to_vmem [thread:$0]  %s0, 256, %s16, [#allocation4], 128, 128, 8
    $region5: #{tpu_custom_call.1} parent=1 // pred_fallthru
      _
    // Predicated region
    $region6: #{tpu_custom_call.1} parent=1 // pred_check
      _
    $region7: #{tpu_custom_call.1} parent=1 // pred_check_branch
      %23 = sbr.rel (0) target = $region9
    $region8: #{tpu_custom_call.1} parent=1 // pred_region
      %s25 = ssub.s32 64, 64
      %26 = vsyncadd [#allocation7], %s25
      %s28 = sshll.u32 [#allocation6], 4
      %s29 = int_to_ptr.vmem [resolvable:$true] %s28
      %31 = dma.hbm_to_vmem [thread:$0]  %s1, 64, %s29, [#allocation7]
    $region9: #{tpu_custom_call.1} parent=1 // pred_fallthru
      _
    // Predicated region
    $region10: #{tpu_custom_call.1} parent=1 // pred_check
      _
    $region11: #{tpu_custom_call.1} parent=1 // pred_check_branch
      %33 = sbr.rel (0) target = $region13
    $region12: #{tpu_custom_call.1} parent=1 // pred_region
      %34 = dma.done [#allocation4], 256
    $region13: #{tpu_custom_call.1} parent=1 // pred_fallthru
      _
    // Predicated region
    $region14: #{tpu_custom_call.1} parent=1 // pred_check
      _
    $region15: #{tpu_custom_call.1} parent=1 // pred_check_branch
      %36 = sbr.rel (0) target = $region17
    $region16: #{tpu_custom_call.1} parent=1 // pred_region
      %37 = dma.done [#allocation7], 64
    $region17: #{tpu_custom_call.1} parent=1 // pred_fallthru
      _
    %p38 = scmp.eq.s32.totalorder 0, 0
    // Predicated region
    $region18: #{tpu_custom_call.1} parent=1 // pred_check
      %p39 = pneg %p38
    $region19: #{tpu_custom_call.1} parent=1 // pred_check_branch
      %41 = sbr.rel (%p39) target = $region21
    $region20: #{tpu_custom_call.1} parent=1 // pred_region
      %vm42 = vcmask 25600
      %43 = vst.msk [vmem:[#allocation2] sm:$0x3] %vm42, 0.0
    $region21: #{tpu_custom_call.1} parent=1 // pred_fallthru
      _
    %v44 = vld [vmem:[#allocation3] sm:$0xff]
    %v45 = vld [vmem:[#allocation3 + $0x8] sm:$0xff]
    %v46 = vld [vmem:[#allocation2] sm:$0x3]
    %v49 = vcombine.high %v44, %v44
    %v50 = vcombine.high %v45, %v45
    %vm53 = vcmask 1043456
    %v54 = vsel %vm53, %v44, 0.0
    %v55 = vsel %vm53, %v49, 0.0
    %v56 = vadd.f32 %v54, %v55
    %57 = vadd.xlane.f32.xlu0 %v56
    %v58 = vpop.xlane.xlu0 %57
    %v59 = vsel %vm53, %v45, 0.0
    %v60 = vsel %vm53, %v50, 0.0
    %v61 = vadd.f32 %v59, %v60
    %62 = vadd.xlane.f32.xlu0 %v61
    %v63 = vpop.xlane.xlu0 %62
    %v66 = vlaneseq
    %v67 = vand.u32 %v66, 127
    %v68 = vlaneseq
    %v69 = vshrl.u32 %v68, 7
    %v70 = vsub.s32 %v67, %v69
    %v71 = vrot.slane %v58, %v70
    %v72 = vlaneseq
    %v73 = vshrl.u32 %v72, 7
    %v74 = vsub.s32 %v67, %v73
    %v75 = vrot.slane %v63, %v74
    %vm76 = vcmask 1041409
    %v77 = vsel %vm76, %v75, %v71
    %v79 = vadd.f32 %v46, %v77
    %vm80 = vcmask 25600
    %81 = vst.msk [vmem:[#allocation2] sm:$0x3] %vm80, %v79
    // Predicated region
    $region22: #{tpu_custom_call.1} parent=1 // pred_check
      %p82 = pneg %p38
    $region23: #{tpu_custom_call.1} parent=1 // pred_check_branch
      %84 = sbr.rel (%p82) target = $region25
    $region24: #{tpu_custom_call.1} parent=1 // pred_region
      %v85 = vld [vmem:[#allocation2] sm:$0x3]
      %v86 = vmul.f32 %v85, 0.00390625
      %v87 = vld [vmem:[#allocation6] sm:$0xf]
      %vm88 = vcmask 31744
      %v90 = vsel %vm88, %v86, 0
      %v93 = vsel %vm88, %v87, 0
      %95 = vmatprep.subr.mxu0 0.0
      %96 = vmatpush1.xpose.msra.mxu0 %v93
      %97 = vmatprep.subr.mxu0 0.0
      %98 = vmatpush1.xpose.msra.mxu0 0.0
      %99 = vmatprep.subr.mxu0 0.0
      %100 = vmatpush1.xpose.msra.mxu0 0.0
      %101 = vmatprep.subr.mxu0 0.0
      %102 = vmatpush1.xpose.msra.mxu0 0.0
      %103 = vmatprep.subr.mxu0 0.0
      %104 = vmatpush1.xpose.msra.mxu0 0.0
      %105 = vmatprep.subr.mxu0 0.0
      %106 = vmatpush1.xpose.msra.mxu0 0.0
      %107 = vmatprep.subr.mxu0 0.0
      %108 = vmatpush1.xpose.msra.mxu0 0.0
      %109 = vmatprep.subr.mxu0 0.0
      %110 = vmatpush1.xpose.msra.mxu0 0.0
      %111 = vmatprep.subr.mxu0 0.0
      %112 = vmatpush1.xpose.msra.mxu0 0.0
      %113 = vmatprep.subr.mxu0 0.0
      %114 = vmatpush1.xpose.msra.mxu0 0.0
      %115 = vmatprep.subr.mxu0 0.0
      %116 = vmatpush1.xpose.msra.mxu0 0.0
      %117 = vmatprep.subr.mxu0 0.0
      %118 = vmatpush1.xpose.msra.mxu0 0.0
      %119 = vmatprep.subr.mxu0 0.0
      %120 = vmatpush1.xpose.msra.mxu0 0.0
      %121 = vmatprep.subr.mxu0 0.0
      %122 = vmatpush1.xpose.msra.mxu0 0.0
      %123 = vmatprep.subr.mxu0 0.0
      %124 = vmatpush1.xpose.msra.mxu0 0.0
      %125 = vmatprep.subr.mxu0 0.0
      %126 = vmatpush1.xpose.msra.mxu0 0.0
      %127 = vmatprep.subr.mxu0 0.0
      %128 = vmatpush1.xpose.msra.mxu0 0.0
      %129 = vmatprep.subr.mxu0 0.0
      %130 = vmatpush1.xpose.msra.mxu0 0.0
      %131 = vmatprep.subr.mxu0 0.0
      %132 = vmatpush1.xpose.msra.mxu0 0.0
      %133 = vmatprep.subr.mxu0 0.0
      %134 = vmatpush1.xpose.msra.mxu0 0.0
      %135 = vmatprep.subr.mxu0 0.0
      %136 = vmatpush1.xpose.msra.mxu0 0.0
      %137 = vmatprep.subr.mxu0 0.0
      %138 = vmatpush1.xpose.msra.mxu0 0.0
      %139 = vmatprep.subr.mxu0 0.0
      %140 = vmatpush1.xpose.msra.mxu0 0.0
      %141 = vmatprep.subr.mxu0 0.0
      %142 = vmatpush1.xpose.msra.mxu0 0.0
      %143 = vmatprep.subr.mxu0 0.0
      %144 = vmatpush1.xpose.msra.mxu0 0.0
      %145 = vmatprep.subr.mxu0 0.0
      %146 = vmatpush1.xpose.msra.mxu0 0.0
      %147 = vmatprep.subr.mxu0 0.0
      %148 = vmatpush1.xpose.msra.mxu0 0.0
      %149 = vmatprep.subr.mxu0 0.0
      %150 = vmatpush1.xpose.msra.mxu0 0.0
      %151 = vmatprep.subr.mxu0 0.0
      %152 = vmatpush1.xpose.msra.mxu0 0.0
      %153 = vmatprep.subr.mxu0 0.0
      %154 = vmatpush1.xpose.msra.mxu0 0.0
      %155 = vmatprep.subr.mxu0 0.0
      %156 = vmatpush1.xpose.msra.mxu0 0.0
      %157 = vmatprep.subr.mxu0 0.0
      %158 = vmatpush1.xpose.msra.mxu0 0.0
      %159 = vmatprep.mubr.f32.mxu0 0.0
      %160 = vmatmul.mubr.f32.gmra.mrb[0].mxu0 %v90
      %v161 = vpop.f32.mrb[0].mxu0
      %v162 = vadd.f32 0.0, %v161
      %v163 = vpop.f32.mrb[0].mxu0
      %164 = vdwg.mxu0
      %v165 = vmax.f32 %v162, 0.0
      %v166 = vxor.u32 %v165, 2147483648
      %v167 = vmul.f32 %v166, 1.442695
      %v168 = vpow.pop %v167
      %v169 = vadd.f32 %v168, 1.0
      %v170 = vrcp.pop %v169
      %v171 = vmul.f32 1.0, %v170
      %172 = vst.msk [vmem:[#allocation8] sm:$0x3] %vm80, %v171
    $region25: #{tpu_custom_call.1} parent=1 // pred_fallthru
      _
    // Predicated region
    $region26: #{tpu_custom_call.1} parent=1 // pred_check
      _
    $region27: #{tpu_custom_call.1} parent=1 // pred_check_branch
      %174 = sbr.rel (0) target = $region29
    $region28: #{tpu_custom_call.1} parent=1 // pred_region
      %s176 = ssub.s32 32, 32
      %177 = vsyncadd [#allocation5], %s176
      %s179 = sshll.u32 [#allocation8], 4
      %s180 = int_to_ptr.vmem [resolvable:$true] %s179
      %182 = dma.vmem_to_hbm [thread:$0]  %s180, 32, %s2, [#allocation5]
    $region29: #{tpu_custom_call.1} parent=1 // pred_fallthru
      _
    // Predicated region
    $region30: #{tpu_custom_call.1} parent=1 // pred_check
      _
    $region31: #{tpu_custom_call.1} parent=1 // pred_check_branch
      %184 = sbr.rel (0) target = $region33
    $region32: #{tpu_custom_call.1} parent=1 // pred_region
      %185 = dma.done [#allocation5], 32
    $region33: #{tpu_custom_call.1} parent=1 // pred_fallthru
      _
    %186 = vsyncpa [#allocation4], 1
    %187 = vsyncpa [#allocation7], 1
    %188 = vsyncpa [#allocation5], 1

</llo_original>
